<compile_context>
chip_gen: v5e
topology: v5e:2x2
jax: 0.10.0
libtpu: 0.0.40
codegen_flags: <defaults>
</compile_context>

<pallas_src>
import jax
import jax.numpy as jnp
from jax.experimental import pallas as pl
from jax.experimental.pallas import tpu as pltpu

EPS = 1e-5  # PyTorch BatchNorm2d default


def _channel_totals(row, cout, width):
    """row: (1, width*cout) per-lane sums, lane layout w*cout + c.

    Returns per-channel totals (summed over the `width` groups inside the lane dim)
    replicated back onto every lane, using lane rotations only (exact f32, XLU slot)."""
    if width & (width - 1) == 0:              # log2(width) rotate+add steps
        total = row
        shift = cout
        while shift < cout * width:
            total = total + pltpu.roll(total, shift, 1)
            shift *= 2
        return total
    total = row                               # generic fallback
    for w in range(1, width):
        total = total + pltpu.roll(row, w * cout, 1)
    return total


def _make_double_conv_kernel(N, H, W, Cin, Cout):
    M = N * H                  # rows of the lane-dense activation matrix
    Cn = W * Cout              # output lane width per ky tap (128 in the test)
    inv_cnt = 1.0 / float(N * H * W)

    def kernel(x_ref, t1_ref, t2_ref, gb_ref, o_ref):
        # Row-position masks shared by both layers: which output rows have a valid
        # previous / next input row inside the same image (handles the H zero-padding
        # and the batch boundaries at once).
        h_local = jax.lax.broadcasted_iota(jnp.int32, (M, 1), 0) % H
        has_prev = h_local != 0
        has_next = h_local != (H - 1)
        zero_row = jnp.zeros((1, Cn), jnp.float32)

        gb = gb_ref[...]                      # (4, Cn) f32: rows = g1, b1, g2, b2

        def conv_bn_relu(a_bf16, t_ref, gamma, beta):
            # 3x3 conv as ONE MXU matmul: kx taps, input channels and the W zero-padding
            # live in the block-Toeplitz weight; the three ky taps are concatenated along
            # the output lanes.  f32 accumulation.
            y = jnp.dot(a_bf16, t_ref[...], preferred_element_type=jnp.float32)
            yk0, yk1, yk2 = y[:, :Cn], y[:, Cn:2 * Cn], y[:, 2 * Cn:]
            # ky=0 / ky=2 contributions come from the previous / next image row: shift
            # the matmul results by one row and mask image edges (no padded scratch).
            y_prev = jnp.concatenate([zero_row, yk0[:M - 1, :]], axis=0)
            y_next = jnp.concatenate([yk2[1:, :], zero_row], axis=0)
            acc = (yk1
                   + jnp.where(has_prev, y_prev, 0.0)
                   + jnp.where(has_next, y_next, 0.0))          # (M, Cn) f32

            # BatchNorm2d training-mode batch stats (biased var), two-pass f32.
            mean = _channel_totals(jnp.sum(acc, axis=0, keepdims=True),
                                   Cout, W) * inv_cnt           # per-channel, per-lane
            d = acc - mean
            var = _channel_totals(jnp.sum(d * d, axis=0, keepdims=True),
                                  Cout, W) * inv_cnt
            scale = gamma * jax.lax.rsqrt(var + EPS)            # (1, Cn)
            shift = beta - mean * scale
            return jnp.maximum(acc * scale + shift, 0.0)        # ReLU, (M, Cn) f32

        # Layer 1: cast the lane-dense input to bf16 once for the MXU.
        a1 = x_ref[...].astype(jnp.bfloat16)                    # (M, W*Cin)
        y1 = conv_bn_relu(a1, t1_ref, gb[0:1], gb[1:2])

        # Layer 2: the intermediate activation never leaves VMEM; one bf16 cast.
        y2 = conv_bn_relu(y1.astype(jnp.bfloat16), t2_ref, gb[2:3], gb[3:4])

        # Lane-dense store: last dim = W*Cout (multiple of 128) -> unmasked vst.
        o_ref[...] = y2.astype(o_ref.dtype)

    return kernel


def _toeplitz_cat(w_hwio, W):
    """(3,3,cin,cout) HWIO weights -> (W*cin, 3*W*cout) block-Toeplitz matrix.

    Column block ky contracts one input row (lane layout wp*cin + ci) against kernel
    row ky's kx taps and input channels, producing output lanes wo*cout + co; the width
    zero-padding is folded in as zero blocks."""
    kh, kw, cin, cout = w_hwio.shape
    wp = jnp.arange(W)[:, None]                     # input column
    wo = jnp.arange(W)[None, :]                     # output column
    kx = wp - wo + (kw // 2)                        # tap index (kw=3 -> +1)
    valid = ((kx >= 0) & (kx < kw)).astype(w_hwio.dtype)          # (W, W)
    blocks = w_hwio[:, jnp.clip(kx, 0, kw - 1)]                   # (kh, W, W, cin, cout)
    blocks = blocks * valid[None, :, :, None, None]
    t = blocks.transpose(0, 1, 3, 2, 4).reshape(kh, W * cin, W * cout)   # (3, K, Ncol)
    # Concatenate the three ky blocks along the output lanes: (K, 3*Ncol).
    return jnp.transpose(t, (1, 0, 2)).reshape(W * cin, kh * W * cout)


def double_conv(x_nchw, params):
    """Forward pass of DoubleConv. Input/output are NCHW f32 to match PyTorch."""
    N, Cin, H, W = x_nchw.shape
    Cout = params["w1"].shape[0]
    M = N * H

    # NCHW -> lane-dense (N*H, W*Cin): pure layout plumbing in the wrapper.
    x2d = jnp.transpose(x_nchw, (0, 2, 3, 1)).reshape(M, W * Cin)

    # OIHW -> HWIO -> block-Toeplitz (ky concatenated along output lanes), bf16 for the
    # MXU (accumulation stays f32).
    w1 = jnp.transpose(params["w1"], (2, 3, 1, 0))
    w2 = jnp.transpose(params["w2"], (2, 3, 1, 0))
    t1 = _toeplitz_cat(w1, W).astype(jnp.bfloat16)        # (W*Cin,  3*W*Cout)
    t2 = _toeplitz_cat(w2, W).astype(jnp.bfloat16)        # (W*Cout, 3*W*Cout)

    # gamma/beta packed into ONE (4, W*Cout) input, pre-expanded to the lane layout.
    def lanes(p):
        return jnp.tile(p.reshape(1, Cout).astype(jnp.float32), (1, W))
    gb = jnp.concatenate([lanes(params["g1"]), lanes(params["b1"]),
                          lanes(params["g2"]), lanes(params["b2"])], axis=0)

    kernel = _make_double_conv_kernel(N, H, W, Cin, Cout)

    def full(shape):
        return pl.BlockSpec(shape, lambda *_: (0,) * len(shape))

    out2d = pl.pallas_call(
        kernel,
        out_shape=jax.ShapeDtypeStruct((M, W * Cout), jnp.float32),
        grid=(1,),
        in_specs=[
            full((M, W * Cin)),
            full((W * Cin, 3 * W * Cout)),
            full((W * Cout, 3 * W * Cout)),
            full((4, W * Cout)),
        ],
        out_specs=full((M, W * Cout)),
        compiler_params=pltpu.CompilerParams(
            dimension_semantics=("arbitrary",),
            vmem_limit_bytes=32 * 1024 * 1024),
    )(x2d, t1, t2, gb)

    # Back to NCHW to match the PyTorch module (keep NHWC downstream if possible).
    return jnp.transpose(out2d.reshape(N, H, W, Cout), (0, 3, 1, 2))


def _reference(x_nchw, params):
    """Pure-JAX f32 reference (PyTorch training-mode BN forward semantics)."""
    def block(x, w_oihw, g, b):
        y = jax.lax.conv_general_dilated(
            x, w_oihw, window_strides=(1, 1), padding=((1, 1), (1, 1)),
            dimension_numbers=("NCHW", "OIHW", "NCHW"))
        mean = jnp.mean(y, axis=(0, 2, 3), keepdims=True)
        var = jnp.mean((y - mean) ** 2, axis=(0, 2, 3), keepdims=True)
        y = (y - mean) * jax.lax.rsqrt(var + EPS)
        y = y * g.reshape(1, -1, 1, 1) + b.reshape(1, -1, 1, 1)
        return jnp.maximum(y, 0.0)

    y = block(x_nchw, params["w1"], params["g1"], params["b1"])
    return block(y, params["w2"], params["g2"], params["b2"])


if __name__ == "__main__":
    in_channels, out_channels = 4, 8
    N, H, W = 2, 16, 16

    key = jax.random.PRNGKey(0)
    k_x, k_w1, k_w2, k_g1, k_b1, k_g2, k_b2 = jax.random.split(key, 7)

    x = jax.random.normal(k_x, (N, in_channels, H, W), jnp.float32)

    # Deterministic synthetic parameters (Conv2d bias=False in the module).
    fan1 = in_channels * 9
    fan2 = out_channels * 9
    params = {
        "w1": jax.random.normal(k_w1, (out_channels, in_channels, 3, 3),
                                jnp.float32) * (2.0 / fan1) ** 0.5,
        "w2": jax.random.normal(k_w2, (out_channels, out_channels, 3, 3),
                                jnp.float32) * (2.0 / fan2) ** 0.5,
        "g1": 1.0 + 0.1 * jax.random.normal(k_g1, (out_channels,), jnp.float32),
        "b1": 0.1 * jax.random.normal(k_b1, (out_channels,), jnp.float32),
        "g2": 1.0 + 0.1 * jax.random.normal(k_g2, (out_channels,), jnp.float32),
        "b2": 0.1 * jax.random.normal(k_b2, (out_channels,), jnp.float32),
    }

    out = jax.block_until_ready(jax.jit(double_conv)(x, params))
    assert out.shape == (N, out_channels, H, W), out.shape

    ref = jax.block_until_ready(_reference(x, params))
    # MXU operands are bf16 (f32 accumulation, f32 BN/ReLU); tolerance sized for bf16
    # input/weight rounding vs. the pure-f32 reference.
    assert jnp.allclose(out, ref, rtol=5e-2, atol=5e-2), \
        float(jnp.max(jnp.abs(out - ref)))

    print("KERNEL_OK")
</pallas_src>

<mosaic_0001>
module attributes {stable_mosaic.version = 11 : i64} {
  func.func @kernel(%arg0: i32, %arg1: memref<32x64xf32, #tpu.memory_space<vmem>>, %arg2: memref<64x384xbf16, #tpu.memory_space<vmem>>, %arg3: memref<128x384xbf16, #tpu.memory_space<vmem>>, %arg4: memref<4x128xf32, #tpu.memory_space<vmem>>, %arg5: memref<32x128xf32, #tpu.memory_space<vmem>>) attributes {dimension_semantics = [#tpu.dimension_semantics<arbitrary>], iteration_bounds = array<i64: 1>, scalar_prefetch = 0 : i64, scratch_operands = 0 : i64, tpu.core_type = #tpu.core_type<tc>, window_params = [{pipeline_mode = #tpu.pipeline_mode<synchronous>, transform_indices = @transform_0, window_bounds = array<i64: 32, 64>}, {pipeline_mode = #tpu.pipeline_mode<synchronous>, transform_indices = @transform_1, window_bounds = array<i64: 64, 384>}, {pipeline_mode = #tpu.pipeline_mode<synchronous>, transform_indices = @transform_2, window_bounds = array<i64: 128, 384>}, {pipeline_mode = #tpu.pipeline_mode<synchronous>, transform_indices = @transform_3, window_bounds = array<i64: 4, 128>}, {pipeline_mode = #tpu.pipeline_mode<synchronous>, transform_indices = @transform_4, window_bounds = array<i64: 32, 128>}]} {
    %0 = tpu.iota {dimensions = array<i32: 0>} : vector<32x1xi32>
    %c16_i32 = arith.constant 16 : i32
    %c0_i32 = arith.constant 0 : i32
    %1 = arith.cmpi eq, %c16_i32, %c0_i32 : i32
    %c1_i32 = arith.constant 1 : i32
    %2 = arith.select %1, %c1_i32, %c16_i32 : i32
    %3 = vector.broadcast %2 : i32 to vector<32x1xi32>
    %4 = arith.remsi %0, %3 : vector<32x1xi32>
    %c0_i32_0 = arith.constant 0 : i32
    %5 = vector.broadcast %c0_i32_0 : i32 to vector<32x1xi32>
    %6 = arith.cmpi ne, %4, %5 : vector<32x1xi32>
    %c0_i32_1 = arith.constant 0 : i32
    %7 = vector.broadcast %c0_i32_1 : i32 to vector<32x1xi32>
    %8 = arith.cmpi slt, %4, %7 : vector<32x1xi32>
    %c0_i32_2 = arith.constant 0 : i32
    %9 = arith.cmpi slt, %2, %c0_i32_2 : i32
    %10 = vector.broadcast %9 : i1 to vector<32x1xi1>
    %11 = vector.broadcast %10 : vector<32x1xi1> to vector<32x1xi1>
    %12 = arith.xori %8, %11 : vector<32x1xi1>
    %13 = arith.andi %12, %6 : vector<32x1xi1>
    %14 = vector.broadcast %2 : i32 to vector<32x1xi32>
    %15 = arith.addi %4, %14 : vector<32x1xi32>
    %16 = arith.select %13, %15, %4 : vector<32x1xi1>, vector<32x1xi32>
    %c0_i32_3 = arith.constant 0 : i32
    %17 = vector.broadcast %c0_i32_3 : i32 to vector<32x1xi32>
    %18 = arith.cmpi ne, %16, %17 : vector<32x1xi32>
    %c15_i32 = arith.constant 15 : i32
    %19 = vector.broadcast %c15_i32 : i32 to vector<32x1xi32>
    %20 = arith.cmpi ne, %16, %19 : vector<32x1xi32>
    %cst = arith.constant 0.000000e+00 : f32
    %21 = vector.broadcast %cst : f32 to vector<1x128xf32>
    %c0 = arith.constant 0 : index
    %c0_4 = arith.constant 0 : index
    %22 = vector.load %arg4[%c0, %c0_4] : memref<4x128xf32, #tpu.memory_space<vmem>>, vector<4x128xf32>
    %c0_5 = arith.constant 0 : index
    %c0_6 = arith.constant 0 : index
    %23 = vector.load %arg1[%c0_5, %c0_6] : memref<32x64xf32, #tpu.memory_space<vmem>>, vector<32x64xf32>
    %24 = arith.truncf %23 : vector<32x64xf32> to vector<32x64xbf16>
    %25 = vector.extract_strided_slice %22 {offsets = [0, 0], sizes = [1, 128], strides = [1, 1]} : vector<4x128xf32> to vector<1x128xf32>
    %26 = vector.extract_strided_slice %22 {offsets = [1, 0], sizes = [1, 128], strides = [1, 1]} : vector<4x128xf32> to vector<1x128xf32>
    %c0_7 = arith.constant 0 : index
    %c0_8 = arith.constant 0 : index
    %27 = vector.load %arg2[%c0_7, %c0_8] : memref<64x384xbf16, #tpu.memory_space<vmem>>, vector<64x384xbf16>
    %cst_9 = arith.constant dense<0.000000e+00> : vector<32x384xf32>
    %28 = tpu.matmul %24, %27, %cst_9 {dimension_numbers = #tpu.dot_dimension_numbers<[1], [0], [0], [1], [0, 0, 1, 1], [], []>} : vector<32x64xbf16>, vector<64x384xbf16>, vector<32x384xf32> -> vector<32x384xf32>
    %29 = vector.extract_strided_slice %28 {offsets = [0, 0], sizes = [32, 128], strides = [1, 1]} : vector<32x384xf32> to vector<32x128xf32>
    %30 = vector.extract_strided_slice %28 {offsets = [0, 128], sizes = [32, 128], strides = [1, 1]} : vector<32x384xf32> to vector<32x128xf32>
    %31 = vector.extract_strided_slice %28 {offsets = [0, 256], sizes = [32, 128], strides = [1, 1]} : vector<32x384xf32> to vector<32x128xf32>
    %32 = vector.extract_strided_slice %29 {offsets = [0, 0], sizes = [31, 128], strides = [1, 1]} : vector<32x128xf32> to vector<31x128xf32>
    %33 = tpu.concatenate %21, %32 in 0 : vector<1x128xf32>, vector<31x128xf32> -> vector<32x128xf32>
    %34 = vector.extract_strided_slice %31 {offsets = [1, 0], sizes = [31, 128], strides = [1, 1]} : vector<32x128xf32> to vector<31x128xf32>
    %35 = tpu.concatenate %34, %21 in 0 : vector<31x128xf32>, vector<1x128xf32> -> vector<32x128xf32>
    %cst_10 = arith.constant 0.000000e+00 : f32
    %36 = vector.shape_cast %18 : vector<32x1xi1> to vector<32x1xi1>
    %37 = vector.broadcast %36 : vector<32x1xi1> to vector<32x128xi1>
    %38 = vector.broadcast %cst_10 : f32 to vector<32x128xf32>
    %39 = arith.select %37, %33, %38 : vector<32x128xi1>, vector<32x128xf32>
    %40 = arith.addf %30, %39 : vector<32x128xf32>
    %cst_11 = arith.constant 0.000000e+00 : f32
    %41 = vector.shape_cast %20 : vector<32x1xi1> to vector<32x1xi1>
    %42 = vector.broadcast %41 : vector<32x1xi1> to vector<32x128xi1>
    %43 = vector.broadcast %cst_11 : f32 to vector<32x128xf32>
    %44 = arith.select %42, %35, %43 : vector<32x128xi1>, vector<32x128xf32>
    %45 = arith.addf %40, %44 : vector<32x128xf32>
    %cst_12 = arith.constant dense<0.000000e+00> : vector<128xf32>
    %46 = vector.multi_reduction <add>, %45, %cst_12 [0] : vector<32x128xf32> to vector<128xf32>
    %47 = vector.shape_cast %46 : vector<128xf32> to vector<1x128xf32>
    %c8_i32 = arith.constant 8 : i32
    %48 = tpu.dynamic_rotate %47 by %c8_i32 dim 1 : vector<1x128xf32>, i32 -> vector<1x128xf32>
    %49 = arith.addf %47, %48 : vector<1x128xf32>
    %c16_i32_13 = arith.constant 16 : i32
    %50 = tpu.dynamic_rotate %49 by %c16_i32_13 dim 1 : vector<1x128xf32>, i32 -> vector<1x128xf32>
    %51 = arith.addf %49, %50 : vector<1x128xf32>
    %c32_i32 = arith.constant 32 : i32
    %52 = tpu.dynamic_rotate %51 by %c32_i32 dim 1 : vector<1x128xf32>, i32 -> vector<1x128xf32>
    %53 = arith.addf %51, %52 : vector<1x128xf32>
    %c64_i32 = arith.constant 64 : i32
    %54 = tpu.dynamic_rotate %53 by %c64_i32 dim 1 : vector<1x128xf32>, i32 -> vector<1x128xf32>
    %55 = arith.addf %53, %54 : vector<1x128xf32>
    %cst_14 = arith.constant 0.001953125 : f32
    %56 = vector.broadcast %cst_14 : f32 to vector<1x128xf32>
    %57 = arith.mulf %55, %56 : vector<1x128xf32>
    %58 = vector.broadcast %57 : vector<1x128xf32> to vector<32x128xf32>
    %59 = arith.subf %45, %58 : vector<32x128xf32>
    %60 = arith.mulf %59, %59 : vector<32x128xf32>
    %cst_15 = arith.constant dense<0.000000e+00> : vector<128xf32>
    %61 = vector.multi_reduction <add>, %60, %cst_15 [0] : vector<32x128xf32> to vector<128xf32>
    %62 = vector.shape_cast %61 : vector<128xf32> to vector<1x128xf32>
    %c8_i32_16 = arith.constant 8 : i32
    %63 = tpu.dynamic_rotate %62 by %c8_i32_16 dim 1 : vector<1x128xf32>, i32 -> vector<1x128xf32>
    %64 = arith.addf %62, %63 : vector<1x128xf32>
    %c16_i32_17 = arith.constant 16 : i32
    %65 = tpu.dynamic_rotate %64 by %c16_i32_17 dim 1 : vector<1x128xf32>, i32 -> vector<1x128xf32>
    %66 = arith.addf %64, %65 : vector<1x128xf32>
    %c32_i32_18 = arith.constant 32 : i32
    %67 = tpu.dynamic_rotate %66 by %c32_i32_18 dim 1 : vector<1x128xf32>, i32 -> vector<1x128xf32>
    %68 = arith.addf %66, %67 : vector<1x128xf32>
    %c64_i32_19 = arith.constant 64 : i32
    %69 = tpu.dynamic_rotate %68 by %c64_i32_19 dim 1 : vector<1x128xf32>, i32 -> vector<1x128xf32>
    %70 = arith.addf %68, %69 : vector<1x128xf32>
    %cst_20 = arith.constant 0.001953125 : f32
    %71 = vector.broadcast %cst_20 : f32 to vector<1x128xf32>
    %72 = arith.mulf %70, %71 : vector<1x128xf32>
    %cst_21 = arith.constant 9.99999974E-6 : f32
    %73 = vector.broadcast %cst_21 : f32 to vector<1x128xf32>
    %74 = arith.addf %72, %73 : vector<1x128xf32>
    %75 = math.rsqrt %74 : vector<1x128xf32>
    %76 = arith.mulf %25, %75 : vector<1x128xf32>
    %77 = arith.mulf %57, %76 : vector<1x128xf32>
    %78 = arith.subf %26, %77 : vector<1x128xf32>
    %79 = vector.broadcast %76 : vector<1x128xf32> to vector<32x128xf32>
    %80 = arith.mulf %45, %79 : vector<32x128xf32>
    %81 = vector.broadcast %78 : vector<1x128xf32> to vector<32x128xf32>
    %82 = arith.addf %80, %81 : vector<32x128xf32>
    %cst_22 = arith.constant 0.000000e+00 : f32
    %83 = vector.broadcast %cst_22 : f32 to vector<32x128xf32>
    %84 = arith.maximumf %82, %83 : vector<32x128xf32>
    %85 = arith.truncf %84 : vector<32x128xf32> to vector<32x128xbf16>
    %86 = vector.extract_strided_slice %22 {offsets = [2, 0], sizes = [1, 128], strides = [1, 1]} : vector<4x128xf32> to vector<1x128xf32>
    %87 = vector.extract_strided_slice %22 {offsets = [3, 0], sizes = [1, 128], strides = [1, 1]} : vector<4x128xf32> to vector<1x128xf32>
    %c0_23 = arith.constant 0 : index
    %c0_24 = arith.constant 0 : index
    %88 = vector.load %arg3[%c0_23, %c0_24] : memref<128x384xbf16, #tpu.memory_space<vmem>>, vector<128x384xbf16>
    %cst_25 = arith.constant dense<0.000000e+00> : vector<32x384xf32>
    %89 = tpu.matmul %85, %88, %cst_25 {dimension_numbers = #tpu.dot_dimension_numbers<[1], [0], [0], [1], [0, 0, 1, 1], [], []>} : vector<32x128xbf16>, vector<128x384xbf16>, vector<32x384xf32> -> vector<32x384xf32>
    %90 = vector.extract_strided_slice %89 {offsets = [0, 0], sizes = [32, 128], strides = [1, 1]} : vector<32x384xf32> to vector<32x128xf32>
    %91 = vector.extract_strided_slice %89 {offsets = [0, 128], sizes = [32, 128], strides = [1, 1]} : vector<32x384xf32> to vector<32x128xf32>
    %92 = vector.extract_strided_slice %89 {offsets = [0, 256], sizes = [32, 128], strides = [1, 1]} : vector<32x384xf32> to vector<32x128xf32>
    %93 = vector.extract_strided_slice %90 {offsets = [0, 0], sizes = [31, 128], strides = [1, 1]} : vector<32x128xf32> to vector<31x128xf32>
    %94 = tpu.concatenate %21, %93 in 0 : vector<1x128xf32>, vector<31x128xf32> -> vector<32x128xf32>
    %95 = vector.extract_strided_slice %92 {offsets = [1, 0], sizes = [31, 128], strides = [1, 1]} : vector<32x128xf32> to vector<31x128xf32>
    %96 = tpu.concatenate %95, %21 in 0 : vector<31x128xf32>, vector<1x128xf32> -> vector<32x128xf32>
    %cst_26 = arith.constant 0.000000e+00 : f32
    %97 = vector.shape_cast %18 : vector<32x1xi1> to vector<32x1xi1>
    %98 = vector.broadcast %97 : vector<32x1xi1> to vector<32x128xi1>
    %99 = vector.broadcast %cst_26 : f32 to vector<32x128xf32>
    %100 = arith.select %98, %94, %99 : vector<32x128xi1>, vector<32x128xf32>
    %101 = arith.addf %91, %100 : vector<32x128xf32>
    %cst_27 = arith.constant 0.000000e+00 : f32
    %102 = vector.shape_cast %20 : vector<32x1xi1> to vector<32x1xi1>
    %103 = vector.broadcast %102 : vector<32x1xi1> to vector<32x128xi1>
    %104 = vector.broadcast %cst_27 : f32 to vector<32x128xf32>
    %105 = arith.select %103, %96, %104 : vector<32x128xi1>, vector<32x128xf32>
    %106 = arith.addf %101, %105 : vector<32x128xf32>
    %cst_28 = arith.constant dense<0.000000e+00> : vector<128xf32>
    %107 = vector.multi_reduction <add>, %106, %cst_28 [0] : vector<32x128xf32> to vector<128xf32>
    %108 = vector.shape_cast %107 : vector<128xf32> to vector<1x128xf32>
    %c8_i32_29 = arith.constant 8 : i32
    %109 = tpu.dynamic_rotate %108 by %c8_i32_29 dim 1 : vector<1x128xf32>, i32 -> vector<1x128xf32>
    %110 = arith.addf %108, %109 : vector<1x128xf32>
    %c16_i32_30 = arith.constant 16 : i32
    %111 = tpu.dynamic_rotate %110 by %c16_i32_30 dim 1 : vector<1x128xf32>, i32 -> vector<1x128xf32>
    %112 = arith.addf %110, %111 : vector<1x128xf32>
    %c32_i32_31 = arith.constant 32 : i32
    %113 = tpu.dynamic_rotate %112 by %c32_i32_31 dim 1 : vector<1x128xf32>, i32 -> vector<1x128xf32>
    %114 = arith.addf %112, %113 : vector<1x128xf32>
    %c64_i32_32 = arith.constant 64 : i32
    %115 = tpu.dynamic_rotate %114 by %c64_i32_32 dim 1 : vector<1x128xf32>, i32 -> vector<1x128xf32>
    %116 = arith.addf %114, %115 : vector<1x128xf32>
    %cst_33 = arith.constant 0.001953125 : f32
    %117 = vector.broadcast %cst_33 : f32 to vector<1x128xf32>
    %118 = arith.mulf %116, %117 : vector<1x128xf32>
    %119 = vector.broadcast %118 : vector<1x128xf32> to vector<32x128xf32>
    %120 = arith.subf %106, %119 : vector<32x128xf32>
    %121 = arith.mulf %120, %120 : vector<32x128xf32>
    %cst_34 = arith.constant dense<0.000000e+00> : vector<128xf32>
    %122 = vector.multi_reduction <add>, %121, %cst_34 [0] : vector<32x128xf32> to vector<128xf32>
    %123 = vector.shape_cast %122 : vector<128xf32> to vector<1x128xf32>
    %c8_i32_35 = arith.constant 8 : i32
    %124 = tpu.dynamic_rotate %123 by %c8_i32_35 dim 1 : vector<1x128xf32>, i32 -> vector<1x128xf32>
    %125 = arith.addf %123, %124 : vector<1x128xf32>
    %c16_i32_36 = arith.constant 16 : i32
    %126 = tpu.dynamic_rotate %125 by %c16_i32_36 dim 1 : vector<1x128xf32>, i32 -> vector<1x128xf32>
    %127 = arith.addf %125, %126 : vector<1x128xf32>
    %c32_i32_37 = arith.constant 32 : i32
    %128 = tpu.dynamic_rotate %127 by %c32_i32_37 dim 1 : vector<1x128xf32>, i32 -> vector<1x128xf32>
    %129 = arith.addf %127, %128 : vector<1x128xf32>
    %c64_i32_38 = arith.constant 64 : i32
    %130 = tpu.dynamic_rotate %129 by %c64_i32_38 dim 1 : vector<1x128xf32>, i32 -> vector<1x128xf32>
    %131 = arith.addf %129, %130 : vector<1x128xf32>
    %cst_39 = arith.constant 0.001953125 : f32
    %132 = vector.broadcast %cst_39 : f32 to vector<1x128xf32>
    %133 = arith.mulf %131, %132 : vector<1x128xf32>
    %cst_40 = arith.constant 9.99999974E-6 : f32
    %134 = vector.broadcast %cst_40 : f32 to vector<1x128xf32>
    %135 = arith.addf %133, %134 : vector<1x128xf32>
    %136 = math.rsqrt %135 : vector<1x128xf32>
    %137 = arith.mulf %86, %136 : vector<1x128xf32>
    %138 = arith.mulf %118, %137 : vector<1x128xf32>
    %139 = arith.subf %87, %138 : vector<1x128xf32>
    %140 = vector.broadcast %137 : vector<1x128xf32> to vector<32x128xf32>
    %141 = arith.mulf %106, %140 : vector<32x128xf32>
    %142 = vector.broadcast %139 : vector<1x128xf32> to vector<32x128xf32>
    %143 = arith.addf %141, %142 : vector<32x128xf32>
    %cst_41 = arith.constant 0.000000e+00 : f32
    %144 = vector.broadcast %cst_41 : f32 to vector<32x128xf32>
    %145 = arith.maximumf %143, %144 : vector<32x128xf32>
    %c0_42 = arith.constant 0 : index
    %c0_43 = arith.constant 0 : index
    %146 = vector.load %arg5[%c0_42, %c0_43] : memref<32x128xf32, #tpu.memory_space<vmem>>, vector<32x128xf32>
    tpu.vector_store %arg5[%c0_42, %c0_43], %145 {strides = array<i32>} : memref<32x128xf32, #tpu.memory_space<vmem>>, vector<32x128xf32>,
    return
  }
  func.func @transform_0(%arg0: i32) -> (i32, i32) {
    %c0_i32 = arith.constant 0 : i32
    %c0_i32_0 = arith.constant 0 : i32
    %c0_i32_1 = arith.constant 0 : i32
    return %c0_i32, %c0_i32_0 : i32, i32
  }
  func.func @transform_1(%arg0: i32) -> (i32, i32) {
    %c0_i32 = arith.constant 0 : i32
    %c0_i32_0 = arith.constant 0 : i32
    %c0_i32_1 = arith.constant 0 : i32
    return %c0_i32, %c0_i32_0 : i32, i32
  }
  func.func @transform_2(%arg0: i32) -> (i32, i32) {
    %c0_i32 = arith.constant 0 : i32
    %c0_i32_0 = arith.constant 0 : i32
    %c0_i32_1 = arith.constant 0 : i32
    return %c0_i32, %c0_i32_0 : i32, i32
  }
  func.func @transform_3(%arg0: i32) -> (i32, i32) {
    %c0_i32 = arith.constant 0 : i32
    %c0_i32_0 = arith.constant 0 : i32
    %c0_i32_1 = arith.constant 0 : i32
    return %c0_i32, %c0_i32_0 : i32, i32
  }
  func.func @transform_4(%arg0: i32) -> (i32, i32) {
    %c0_i32 = arith.constant 0 : i32
    %c0_i32_0 = arith.constant 0 : i32
    %c0_i32_1 = arith.constant 0 : i32
    return %c0_i32, %c0_i32_0 : i32, i32
  }
}

</mosaic_0001>

<llo_original>
// kernel: double_conv.1
$region0: #{double_conv.1}
  #allocation0 [shape = 'u32[]', space=smem, size = 0x4, offset = 0x4, fixed_abs, tag = 'smem constant byte address 0x4 - core index']
  #allocation1 [shape = 'u32[72,128]{1,0:T(1,128)}', space=vmem, size = 0x9000, scoped, tag = 'internal scratch']
  %s0 = inlined_call_operand.vmem [shape: f32[32,64], index: 0, kind: input, shape index: {}]
  %s1 = inlined_call_operand.vmem [shape: bf16[64,384], index: 1, kind: input, shape index: {}]
  %s2 = inlined_call_operand.vmem [shape: bf16[128,384], index: 2, kind: input, shape index: {}]
  %s3 = inlined_call_operand.vmem [shape: f32[4,128], index: 3, kind: input, shape index: {}]
  %s4 = inlined_call_operand.vmem [shape: f32[32,128], index: 4, kind: output, shape index: {}]
  %s5 = sld [smem:[#allocation0]]
  $region26: #{double_conv.1} parent=0
    _
  %s7 = ssub.s32 1, %s5
  %s8 = scalar_select 0, %s7, %s5
  // Predicated region
  $region2: #{double_conv.1} parent=0 // pred_check
    _
  $region3: #{double_conv.1} parent=0 // pred_check_branch
    %10 = sbr.rel (0) target = $region5
  $region4: #{double_conv.1} parent=0 // pred_region
    _
  $region5: #{double_conv.1} parent=0 // pred_fallthru
    _
  // Predicated region
  $region6: #{double_conv.1} parent=0 // pred_check
    _
  $region7: #{double_conv.1} parent=0 // pred_check_branch
    %12 = sbr.rel (0) target = $region9
  $region8: #{double_conv.1} parent=0 // pred_region
    _
  $region9: #{double_conv.1} parent=0 // pred_fallthru
    _
  // Predicated region
  $region10: #{double_conv.1} parent=0 // pred_check
    _
  $region11: #{double_conv.1} parent=0 // pred_check_branch
    %14 = sbr.rel (0) target = $region13
  $region12: #{double_conv.1} parent=0 // pred_region
    _
  $region13: #{double_conv.1} parent=0 // pred_fallthru
    _
  // Predicated region
  $region14: #{double_conv.1} parent=0 // pred_check
    _
  $region15: #{double_conv.1} parent=0 // pred_check_branch
    %16 = sbr.rel (0) target = $region17
  $region16: #{double_conv.1} parent=0 // pred_region
    _
  $region17: #{double_conv.1} parent=0 // pred_fallthru
    _
  %v18 = vlaneseq
  %v19 = vshrl.u32 %v18, 7
  %v20 = vadd.s32 %v19, 8
  %v21 = vadd.s32 %v19, 16
  %v22 = vadd.s32 %v19, 24
  %vm23 = vcmp.lt.s32.totalorder %v19, 0
  %v24 = vsub.s32 0, %v19
  %v25 = vsel %vm23, %v24, %v19
  %v26 = vshrl.u32 %v25, 4
  %v27 = vand.u32 %v25, 15
  %v28 = vsub.s32 0, %v27
  %v29 = vsel %vm23, %v28, %v27
  %vm30 = vcmp.lt.s32.totalorder %v20, 0
  %v31 = vsub.s32 0, %v20
  %v32 = vsel %vm30, %v31, %v20
  %v33 = vshrl.u32 %v32, 4
  %v34 = vand.u32 %v32, 15
  %v35 = vsub.s32 0, %v34
  %v36 = vsel %vm30, %v35, %v34
  %vm37 = vcmp.lt.s32.totalorder %v21, 0
  %v38 = vsub.s32 0, %v21
  %v39 = vsel %vm37, %v38, %v21
  %v40 = vshrl.u32 %v39, 4
  %v41 = vand.u32 %v39, 15
  %v42 = vsub.s32 0, %v41
  %v43 = vsel %vm37, %v42, %v41
  %vm44 = vcmp.lt.s32.totalorder %v22, 0
  %v45 = vsub.s32 0, %v22
  %v46 = vsel %vm44, %v45, %v22
  %v47 = vshrl.u32 %v46, 4
  %v48 = vand.u32 %v46, 15
  %v49 = vsub.s32 0, %v48
  %v50 = vsel %vm44, %v49, %v48
  %vm51 = vcmp.ne.s32.totalorder %v29, 0
  %vm52 = vcmp.ne.s32.totalorder %v36, 0
  %vm53 = vcmp.ne.s32.totalorder %v43, 0
  %vm54 = vcmp.ne.s32.totalorder %v50, 0
  %vm55 = vcmp.lt.s32.totalorder %v29, 0
  %vm56 = vcmp.lt.s32.totalorder %v36, 0
  %vm57 = vcmp.lt.s32.totalorder %v43, 0
  %vm58 = vcmp.lt.s32.totalorder %v50, 0
  %vm59 = vmand %vm55, %vm51
  %vm60 = vmand %vm56, %vm52
  %vm61 = vmand %vm57, %vm53
  %vm62 = vmand %vm58, %vm54
  %v63 = vadd.s32 %v29, 16
  %v64 = vadd.s32 %v36, 16
  %v65 = vadd.s32 %v43, 16
  %v66 = vadd.s32 %v50, 16
  %v67 = vsel %vm59, %v63, %v29
  %v68 = vsel %vm60, %v64, %v36
  %v69 = vsel %vm61, %v65, %v43
  %v70 = vsel %vm62, %v66, %v50
  %vm71 = vcmp.ne.s32.totalorder %v67, 0
  %vm72 = vcmp.ne.s32.totalorder %v68, 0
  %vm73 = vcmp.ne.s32.totalorder %v69, 0
  %vm74 = vcmp.ne.s32.totalorder %v70, 0
  %vm75 = vcmp.ne.s32.totalorder %v67, 15
  %vm76 = vcmp.ne.s32.totalorder %v68, 15
  %vm77 = vcmp.ne.s32.totalorder %v69, 15
  %vm78 = vcmp.ne.s32.totalorder %v70, 15
  %v79 = vld [vmem:[%s3] sm:$0xf]
  %v80 = vld [vmem:[%s0] sm:$0xff]
  %v81 = vld [vmem:[%s0 + $0x8] sm:$0xff]
  %v82 = vld [vmem:[%s0 + $0x10] sm:$0xff]
  %v83 = vld [vmem:[%s0 + $0x18] sm:$0xff]
  %v84 = vpack.c.bf16 %v81, %v80
  %v85 = vpack.c.bf16 %v83, %v82
  %v86 = vld [vmem:[%s1] sm:$0xff]
  %v87 = vld [vmem:[%s1 + $0x8] sm:$0xf]
  %v88 = vld [vmem:[%s1 + $0xc] sm:$0xff]
  %v89 = vld [vmem:[%s1 + $0x14] sm:$0xf]
  %v90 = vld [vmem:[%s1 + $0x18] sm:$0xff]
  %v91 = vld [vmem:[%s1 + $0x20] sm:$0xf]
  %v92 = vld [vmem:[%s1 + $0x24] sm:$0xff]
  %v93 = vld [vmem:[%s1 + $0x2c] sm:$0xf]
  %v94 = vld [vmem:[%s1 + $0x30] sm:$0xff]
  %v95 = vld [vmem:[%s1 + $0x38] sm:$0xf]
  %v96 = vld [vmem:[%s1 + $0x3c] sm:$0xff]
  %v97 = vld [vmem:[%s1 + $0x44] sm:$0xf]
  %v98 = vld [vmem:[%s1 + $0x48] sm:$0xff]
  %v99 = vld [vmem:[%s1 + $0x50] sm:$0xf]
  %v100 = vld [vmem:[%s1 + $0x54] sm:$0xff]
  %v101 = vld [vmem:[%s1 + $0x5c] sm:$0xf]
  %v118 = vunpack.c.l.b16 %v86
  %v119 = vunpack.c.h.b16 %v86
  %v120 = vunpack.c.l.b16 %v87
  %v121 = vunpack.c.l.b16 %v88
  %v122 = vunpack.c.h.b16 %v88
  %v123 = vunpack.c.l.b16 %v89
  %v124 = vunpack.c.l.b16 %v90
  %v125 = vunpack.c.h.b16 %v90
  %v126 = vunpack.c.l.b16 %v91
  %v127 = vunpack.c.l.b16 %v92
  %v128 = vunpack.c.h.b16 %v92
  %v129 = vunpack.c.l.b16 %v93
  %v130 = vunpack.c.l.b16 %v94
  %v131 = vunpack.c.h.b16 %v94
  %v132 = vunpack.c.l.b16 %v95
  %v133 = vunpack.c.l.b16 %v96
  %v134 = vunpack.c.h.b16 %v96
  %v135 = vunpack.c.l.b16 %v97
  %v136 = vunpack.c.l.b16 %v98
  %v137 = vunpack.c.h.b16 %v98
  %v138 = vunpack.c.l.b16 %v99
  %v139 = vunpack.c.l.b16 %v100
  %v140 = vunpack.c.h.b16 %v100
  %v141 = vunpack.c.l.b16 %v101
  %v142 = vpack.c.b16 %v121, %v118
  %v143 = vpack.c.b16 %v122, %v119
  %v144 = vpack.c.b16 %v123, %v120
  %v145 = vpack.c.b16 %v127, %v124
  %v146 = vpack.c.b16 %v128, %v125
  %v147 = vpack.c.b16 %v129, %v126
  %v148 = vpack.c.b16 %v133, %v130
  %v149 = vpack.c.b16 %v134, %v131
  %v150 = vpack.c.b16 %v135, %v132
  %v151 = vpack.c.b16 %v139, %v136
  %v152 = vpack.c.b16 %v140, %v137
  %v153 = vpack.c.b16 %v141, %v138
  %vm166 = vcmask 523264
  %v168 = vsel %vm166, %v84, 0
  %v171 = vsel %vm166, %v85, 0
  %173 = vmatpush.bf16.msra.mxu0 0
  %174 = vmatpush.bf16.msra.mxu0 0
  %175 = vmatpush.bf16.msra.mxu0 0
  %176 = vmatpush.bf16.msra.mxu0 0
  %177 = vmatpush.bf16.msra.mxu0 %v151
  %178 = vmatpush.bf16.msra.mxu0 %v148
  %179 = vmatpush.bf16.msra.mxu0 %v145
  %180 = vmatpush.bf16.msra.mxu0 %v142
  %181 = vmatmul.bf16.gmra.mxu0 %v168
  %v182 = vpop.f32.mrf.mxu0
  %v183 = vadd.f32 0.0, %v182
  %v184 = vpop.f32.mrf.mxu0
  %v185 = vadd.f32 0.0, %v184
  %186 = vmatmul.bf16.gmra.mxu0 %v171
  %v187 = vpop.f32.mrf.mxu0
  %v188 = vadd.f32 0.0, %v187
  %v189 = vpop.f32.mrf.mxu0
  %v190 = vadd.f32 0.0, %v189
  %191 = vdwg.mxu0
  %192 = vmatpush.bf16.msra.mxu0 0
  %193 = vmatpush.bf16.msra.mxu0 0
  %194 = vmatpush.bf16.msra.mxu0 0
  %195 = vmatpush.bf16.msra.mxu0 0
  %196 = vmatpush.bf16.msra.mxu0 %v152
  %197 = vmatpush.bf16.msra.mxu0 %v149
  %198 = vmatpush.bf16.msra.mxu0 %v146
  %199 = vmatpush.bf16.msra.mxu0 %v143
  %200 = vmatmul.bf16.gmra.mxu0 %v168
  %v201 = vpop.f32.mrf.mxu0
  %v202 = vadd.f32 0.0, %v201
  %v203 = vpop.f32.mrf.mxu0
  %v204 = vadd.f32 0.0, %v203
  %205 = vmatmul.bf16.gmra.mxu0 %v171
  %v206 = vpop.f32.mrf.mxu0
  %v207 = vadd.f32 0.0, %v206
  %v208 = vpop.f32.mrf.mxu0
  %v209 = vadd.f32 0.0, %v208
  %210 = vdwg.mxu0
  %211 = vmatpush.bf16.msra.mxu0 0
  %212 = vmatpush.bf16.msra.mxu0 0
  %213 = vmatpush.bf16.msra.mxu0 0
  %214 = vmatpush.bf16.msra.mxu0 0
  %215 = vmatpush.bf16.msra.mxu0 %v153
  %216 = vmatpush.bf16.msra.mxu0 %v150
  %217 = vmatpush.bf16.msra.mxu0 %v147
  %218 = vmatpush.bf16.msra.mxu0 %v144
  %219 = vmatmul.bf16.gmra.mxu0 %v168
  %v220 = vpop.f32.mrf.mxu0
  %v221 = vadd.f32 0.0, %v220
  %v222 = vpop.f32.mrf.mxu0
  %v223 = vadd.f32 0.0, %v222
  %224 = vmatmul.bf16.gmra.mxu0 %v171
  %v225 = vpop.f32.mrf.mxu0
  %v226 = vadd.f32 0.0, %v225
  %v227 = vpop.f32.mrf.mxu0
  %v228 = vadd.f32 0.0, %v227
  %229 = vdwg.mxu0
  %vm234 = vcmask 1040384
  %v235 = vrot.slane %v183, 7
  %v236 = vrot.slane %v185, 7
  %v237 = vsel %vm234, %v235, %v236
  %v238 = vrot.slane %v188, 7
  %v239 = vsel %vm234, %v236, %v238
  %v240 = vrot.slane %v190, 7
  %v241 = vsel %vm234, %v238, %v240
  %v246 = vsel %vm234, 0.0, %v235
  %vm251 = vcmask 1046528
  %v252 = vrot.slane %v221, 1
  %v253 = vrot.slane %v223, 1
  %v254 = vsel %vm251, %v252, %v253
  %v255 = vrot.slane %v226, 1
  %v256 = vsel %vm251, %v253, %v255
  %v257 = vrot.slane %v228, 1
  %v258 = vsel %vm251, %v255, %v257
  %v263 = vsel %vm251, %v257, 0.0
  %v264 = vsel %vm71, 1, 0
  %v265 = vsel %vm72, 1, 0
  %v266 = vsel %vm73, 1, 0
  %v267 = vsel %vm74, 1, 0
  %vm268 = vcmp.eq.s32.totalorder %v264, 1
  %vm269 = vcmp.eq.s32.totalorder %v265, 1
  %vm270 = vcmp.eq.s32.totalorder %v266, 1
  %vm271 = vcmp.eq.s32.totalorder %v267, 1
  %v272 = vsel %vm268, %v246, 0.0
  %v273 = vsel %vm269, %v237, 0.0
  %v274 = vsel %vm270, %v239, 0.0
  %v275 = vsel %vm271, %v241, 0.0
  %v276 = vadd.f32 %v202, %v272
  %v277 = vadd.f32 %v204, %v273
  %v278 = vadd.f32 %v207, %v274
  %v279 = vadd.f32 %v209, %v275
  %v280 = vsel %vm75, 1, 0
  %v281 = vsel %vm76, 1, 0
  %v282 = vsel %vm77, 1, 0
  %v283 = vsel %vm78, 1, 0
  %vm284 = vcmp.eq.s32.totalorder %v280, 1
  %vm285 = vcmp.eq.s32.totalorder %v281, 1
  %vm286 = vcmp.eq.s32.totalorder %v282, 1
  %vm287 = vcmp.eq.s32.totalorder %v283, 1
  %v288 = vsel %vm284, %v254, 0.0
  %v289 = vsel %vm285, %v256, 0.0
  %v290 = vsel %vm286, %v258, 0.0
  %v291 = vsel %vm287, %v263, 0.0
  %v292 = vadd.f32 %v276, %v288
  %v293 = vadd.f32 %v277, %v289
  %v294 = vadd.f32 %v278, %v290
  %v295 = vadd.f32 %v279, %v291
  %v296 = vadd.f32 %v292, %v293
  %v297 = vadd.f32 %v296, %v294
  %v298 = vadd.f32 %v297, %v295
  %v299 = vrot.slane %v298, 4
  %v300 = vadd.f32 %v298, %v299
  %v301 = vrot.slane %v300, 2
  %v302 = vadd.f32 %v300, %v301
  %v303 = vrot.slane %v302, 1
  %v304 = vadd.f32 %v302, %v303
  %305 = vrot.lane.b32.xlu0 %v304, 8
  %v306 = vpop.permute.xlu0 %305
  %v307 = vadd.f32 %v304, %v306
  %308 = vrot.lane.b32.xlu0 %v307, 16
  %v309 = vpop.permute.xlu0 %308
  %v310 = vadd.f32 %v307, %v309
  %311 = vrot.lane.b32.xlu0 %v310, 32
  %v312 = vpop.permute.xlu0 %311
  %v313 = vadd.f32 %v310, %v312
  %314 = vrot.lane.b32.xlu0 %v313, 64
  %v315 = vpop.permute.xlu0 %314
  %v316 = vadd.f32 %v313, %v315
  %v317 = vmul.f32 %v316, 0.001953125
  %v318 = vperm.slane %v317, 0
  %v319 = vsub.f32 %v292, %v318
  %v320 = vsub.f32 %v293, %v318
  %v321 = vsub.f32 %v294, %v318
  %v322 = vsub.f32 %v295, %v318
  %v323 = vmul.f32 %v319, %v319
  %v324 = vmul.f32 %v320, %v320
  %v325 = vmul.f32 %v321, %v321
  %v326 = vmul.f32 %v322, %v322
  %v327 = vadd.f32 %v323, %v324
  %v328 = vadd.f32 %v327, %v325
  %v329 = vadd.f32 %v328, %v326
  %v330 = vrot.slane %v329, 4
  %v331 = vadd.f32 %v329, %v330
  %v332 = vrot.slane %v331, 2
  %v333 = vadd.f32 %v331, %v332
  %v334 = vrot.slane %v333, 1
  %v335 = vadd.f32 %v333, %v334
  %336 = vrot.lane.b32.xlu0 %v335, 8
  %v337 = vpop.permute.xlu0 %336
  %v338 = vadd.f32 %v335, %v337
  %339 = vrot.lane.b32.xlu0 %v338, 16
  %v340 = vpop.permute.xlu0 %339
  %v341 = vadd.f32 %v338, %v340
  %342 = vrot.lane.b32.xlu0 %v341, 32
  %v343 = vpop.permute.xlu0 %342
  %v344 = vadd.f32 %v341, %v343
  %345 = vrot.lane.b32.xlu0 %v344, 64
  %v346 = vpop.permute.xlu0 %345
  %v347 = vadd.f32 %v344, %v346
  %v348 = vmul.f32 %v347, 0.001953125
  %v349 = vadd.f32 %v348, 1e-05
  %v350 = vrsqrt.pop %v349
  %v351 = vmul.f32 %v350, %v349
  %v352 = vmul.f32 %v351, %v350
  %v353 = vmul.f32 0.5, %v352
  %v354 = vsub.f32 1.5, %v353
  %v355 = vmul.f32 %v350, %v354
  %vm356 = vweird.f32 %v349
  %vm357 = vweird.f32 %v350
  %vm358 = vmor %vm356, %vm357
  %v359 = vsel %vm358, %v350, %v355
  %v360 = vmul.f32 %v79, %v359
  %v361 = vmul.f32 %v317, %v360
  %v363 = vrot.slane %v361, 7
  %v365 = vsub.f32 %v79, %v363
  %v366 = vperm.slane %v360, 0
  %v367 = vmul.f32 %v292, %v366
  %v368 = vmul.f32 %v293, %v366
  %v369 = vmul.f32 %v294, %v366
  %v370 = vmul.f32 %v295, %v366
  %v371 = vperm.slane %v365, 1
  %v372 = vadd.f32 %v367, %v371
  %v373 = vadd.f32 %v368, %v371
  %v374 = vadd.f32 %v369, %v371
  %v375 = vadd.f32 %v370, %v371
  %v376 = vmax.f32 %v372, 0.0
  %v377 = vmax.f32 %v373, 0.0
  %v378 = vmax.f32 %v374, 0.0
  %v379 = vmax.f32 %v375, 0.0
  %v380 = vpack.c.bf16 %v377, %v376
  %v381 = vpack.c.bf16 %v379, %v378
  %v382 = vld [vmem:[%s2] sm:$0xff]
  %v383 = vld [vmem:[%s2 + $0x8] sm:$0xf]
  %v384 = vld [vmem:[%s2 + $0xc] sm:$0xff]
  %v385 = vld [vmem:[%s2 + $0x14] sm:$0xf]
  %v386 = vld [vmem:[%s2 + $0x18] sm:$0xff]
  %v387 = vld [vmem:[%s2 + $0x20] sm:$0xf]
  %v388 = vld [vmem:[%s2 + $0x24] sm:$0xff]
  %v389 = vld [vmem:[%s2 + $0x2c] sm:$0xf]
  %v390 = vld [vmem:[%s2 + $0x30] sm:$0xff]
  %v391 = vld [vmem:[%s2 + $0x38] sm:$0xf]
  %v392 = vld [vmem:[%s2 + $0x3c] sm:$0xff]
  %v393 = vld [vmem:[%s2 + $0x44] sm:$0xf]
  %v394 = vld [vmem:[%s2 + $0x48] sm:$0xff]
  %v395 = vld [vmem:[%s2 + $0x50] sm:$0xf]
  %v396 = vld [vmem:[%s2 + $0x54] sm:$0xff]
  %v397 = vld [vmem:[%s2 + $0x5c] sm:$0xf]
  %v398 = vld [vmem:[%s2 + $0x60] sm:$0xff]
  %v399 = vld [vmem:[%s2 + $0x68] sm:$0xf]
  %v400 = vld [vmem:[%s2 + $0x6c] sm:$0xff]
  %v401 = vld [vmem:[%s2 + $0x74] sm:$0xf]
  %v402 = vld [vmem:[%s2 + $0x78] sm:$0xff]
  %v403 = vld [vmem:[%s2 + $0x80] sm:$0xf]
  %v404 = vld [vmem:[%s2 + $0x84] sm:$0xff]
  %v405 = vld [vmem:[%s2 + $0x8c] sm:$0xf]
  %v406 = vld [vmem:[%s2 + $0x90] sm:$0xff]
  %v407 = vld [vmem:[%s2 + $0x98] sm:$0xf]
  %v408 = vld [vmem:[%s2 + $0x9c] sm:$0xff]
  %v409 = vld [vmem:[%s2 + $0xa4] sm:$0xf]
  %v410 = vld [vmem:[%s2 + $0xa8] sm:$0xff]
  %v411 = vld [vmem:[%s2 + $0xb0] sm:$0xf]
  %v412 = vld [vmem:[%s2 + $0xb4] sm:$0xff]
  %v413 = vld [vmem:[%s2 + $0xbc] sm:$0xf]
  %v446 = vunpack.c.l.b16 %v382
  %v447 = vunpack.c.h.b16 %v382
  %v448 = vunpack.c.l.b16 %v383
  %v449 = vunpack.c.l.b16 %v384
  %v450 = vunpack.c.h.b16 %v384
  %v451 = vunpack.c.l.b16 %v385
  %v452 = vunpack.c.l.b16 %v386
  %v453 = vunpack.c.h.b16 %v386
  %v454 = vunpack.c.l.b16 %v387
  %v455 = vunpack.c.l.b16 %v388
  %v456 = vunpack.c.h.b16 %v388
  %v457 = vunpack.c.l.b16 %v389
  %v458 = vunpack.c.l.b16 %v390
  %v459 = vunpack.c.h.b16 %v390
  %v460 = vunpack.c.l.b16 %v391
  %v461 = vunpack.c.l.b16 %v392
  %v462 = vunpack.c.h.b16 %v392
  %v463 = vunpack.c.l.b16 %v393
  %v464 = vunpack.c.l.b16 %v394
  %v465 = vunpack.c.h.b16 %v394
  %v466 = vunpack.c.l.b16 %v395
  %v467 = vunpack.c.l.b16 %v396
  %v468 = vunpack.c.h.b16 %v396
  %v469 = vunpack.c.l.b16 %v397
  %v470 = vunpack.c.l.b16 %v398
  %v471 = vunpack.c.h.b16 %v398
  %v472 = vunpack.c.l.b16 %v399
  %v473 = vunpack.c.l.b16 %v400
  %v474 = vunpack.c.h.b16 %v400
  %v475 = vunpack.c.l.b16 %v401
  %v476 = vunpack.c.l.b16 %v402
  %v477 = vunpack.c.h.b16 %v402
  %v478 = vunpack.c.l.b16 %v403
  %v479 = vunpack.c.l.b16 %v404
  %v480 = vunpack.c.h.b16 %v404
  %v481 = vunpack.c.l.b16 %v405
  %v482 = vunpack.c.l.b16 %v406
  %v483 = vunpack.c.h.b16 %v406
  %v484 = vunpack.c.l.b16 %v407
  %v485 = vunpack.c.l.b16 %v408
  %v486 = vunpack.c.h.b16 %v408
  %v487 = vunpack.c.l.b16 %v409
  %v488 = vunpack.c.l.b16 %v410
  %v489 = vunpack.c.h.b16 %v410
  %v490 = vunpack.c.l.b16 %v411
  %v491 = vunpack.c.l.b16 %v412
  %v492 = vunpack.c.h.b16 %v412
  %v493 = vunpack.c.l.b16 %v413
  %v494 = vpack.c.b16 %v449, %v446
  %v495 = vpack.c.b16 %v450, %v447
  %v496 = vpack.c.b16 %v451, %v448
  %v497 = vpack.c.b16 %v455, %v452
  %v498 = vpack.c.b16 %v456, %v453
  %v499 = vpack.c.b16 %v457, %v454
  %v500 = vpack.c.b16 %v461, %v458
  %v501 = vpack.c.b16 %v462, %v459
  %v502 = vpack.c.b16 %v463, %v460
  %v503 = vpack.c.b16 %v467, %v464
  %v504 = vpack.c.b16 %v468, %v465
  %v505 = vpack.c.b16 %v469, %v466
  %v506 = vpack.c.b16 %v473, %v470
  %v507 = vpack.c.b16 %v474, %v471
  %v508 = vpack.c.b16 %v475, %v472
  %v509 = vpack.c.b16 %v479, %v476
  %v510 = vpack.c.b16 %v480, %v477
  %v511 = vpack.c.b16 %v481, %v478
  %v512 = vpack.c.b16 %v485, %v482
  %v513 = vpack.c.b16 %v486, %v483
  %v514 = vpack.c.b16 %v487, %v484
  %v515 = vpack.c.b16 %v491, %v488
  %v516 = vpack.c.b16 %v492, %v489
  %v517 = vpack.c.b16 %v493, %v490
  %542 = vmatpush.bf16.msra.mxu0 %v515
  %543 = vmatpush.bf16.msra.mxu0 %v512
  %544 = vmatpush.bf16.msra.mxu0 %v509
  %545 = vmatpush.bf16.msra.mxu0 %v506
  %546 = vmatpush.bf16.msra.mxu0 %v503
  %547 = vmatpush.bf16.msra.mxu0 %v500
  %548 = vmatpush.bf16.msra.mxu0 %v497
  %549 = vmatpush.bf16.msra.mxu0 %v494
  %550 = vmatmul.bf16.gmra.mxu0 %v380
  %v551 = vpop.f32.mrf.mxu0
  %v552 = vadd.f32 0.0, %v551
  %v553 = vpop.f32.mrf.mxu0
  %v554 = vadd.f32 0.0, %v553
  %555 = vmatmul.bf16.gmra.mxu0 %v381
  %v556 = vpop.f32.mrf.mxu0
  %v557 = vadd.f32 0.0, %v556
  %v558 = vpop.f32.mrf.mxu0
  %v559 = vadd.f32 0.0, %v558
  %560 = vdwg.mxu0
  %561 = vmatpush.bf16.msra.mxu0 %v516
  %562 = vmatpush.bf16.msra.mxu0 %v513
  %563 = vmatpush.bf16.msra.mxu0 %v510
  %564 = vmatpush.bf16.msra.mxu0 %v507
  %565 = vmatpush.bf16.msra.mxu0 %v504
  %566 = vmatpush.bf16.msra.mxu0 %v501
  %567 = vmatpush.bf16.msra.mxu0 %v498
  %568 = vmatpush.bf16.msra.mxu0 %v495
  %569 = vmatmul.bf16.gmra.mxu0 %v380
  %v570 = vpop.f32.mrf.mxu0
  %v571 = vadd.f32 0.0, %v570
  %v572 = vpop.f32.mrf.mxu0
  %v573 = vadd.f32 0.0, %v572
  %574 = vmatmul.bf16.gmra.mxu0 %v381
  %v575 = vpop.f32.mrf.mxu0
  %v576 = vadd.f32 0.0, %v575
  %v577 = vpop.f32.mrf.mxu0
  %v578 = vadd.f32 0.0, %v577
  %579 = vdwg.mxu0
  %580 = vmatpush.bf16.msra.mxu0 %v517
  %581 = vmatpush.bf16.msra.mxu0 %v514
  %582 = vmatpush.bf16.msra.mxu0 %v511
  %583 = vmatpush.bf16.msra.mxu0 %v508
  %584 = vmatpush.bf16.msra.mxu0 %v505
  %585 = vmatpush.bf16.msra.mxu0 %v502
  %586 = vmatpush.bf16.msra.mxu0 %v499
  %587 = vmatpush.bf16.msra.mxu0 %v496
  %588 = vmatmul.bf16.gmra.mxu0 %v380
  %v589 = vpop.f32.mrf.mxu0
  %v590 = vadd.f32 0.0, %v589
  %v591 = vpop.f32.mrf.mxu0
  %v592 = vadd.f32 0.0, %v591
  %593 = vmatmul.bf16.gmra.mxu0 %v381
  %v594 = vpop.f32.mrf.mxu0
  %v595 = vadd.f32 0.0, %v594
  %v596 = vpop.f32.mrf.mxu0
  %v597 = vadd.f32 0.0, %v596
  %598 = vdwg.mxu0
  %v603 = vrot.slane %v552, 7
  %v604 = vrot.slane %v554, 7
  %v605 = vsel %vm234, %v603, %v604
  %v606 = vrot.slane %v557, 7
  %v607 = vsel %vm234, %v604, %v606
  %v608 = vrot.slane %v559, 7
  %v609 = vsel %vm234, %v606, %v608
  %v614 = vsel %vm234, 0.0, %v603
  %v619 = vrot.slane %v590, 1
  %v620 = vrot.slane %v592, 1
  %v621 = vsel %vm251, %v619, %v620
  %v622 = vrot.slane %v595, 1
  %v623 = vsel %vm251, %v620, %v622
  %v624 = vrot.slane %v597, 1
  %v625 = vsel %vm251, %v622, %v624
  %v630 = vsel %vm251, %v624, 0.0
  %v631 = vsel %vm268, %v614, 0.0
  %v632 = vsel %vm269, %v605, 0.0
  %v633 = vsel %vm270, %v607, 0.0
  %v634 = vsel %vm271, %v609, 0.0
  %v635 = vadd.f32 %v571, %v631
  %v636 = vadd.f32 %v573, %v632
  %v637 = vadd.f32 %v576, %v633
  %v638 = vadd.f32 %v578, %v634
  %v639 = vsel %vm284, %v621, 0.0
  %v640 = vsel %vm285, %v623, 0.0
  %v641 = vsel %vm286, %v625, 0.0
  %v642 = vsel %vm287, %v630, 0.0
  %v643 = vadd.f32 %v635, %v639
  %v644 = vadd.f32 %v636, %v640
  %v645 = vadd.f32 %v637, %v641
  %v646 = vadd.f32 %v638, %v642
  %v647 = vadd.f32 %v643, %v644
  %v648 = vadd.f32 %v647, %v645
  %v649 = vadd.f32 %v648, %v646
  %v650 = vrot.slane %v649, 4
  %v651 = vadd.f32 %v649, %v650
  %v652 = vrot.slane %v651, 2
  %v653 = vadd.f32 %v651, %v652
  %v654 = vrot.slane %v653, 1
  %v655 = vadd.f32 %v653, %v654
  %656 = vrot.lane.b32.xlu0 %v655, 8
  %v657 = vpop.permute.xlu0 %656
  %v658 = vadd.f32 %v655, %v657
  %659 = vrot.lane.b32.xlu0 %v658, 16
  %v660 = vpop.permute.xlu0 %659
  %v661 = vadd.f32 %v658, %v660
  %662 = vrot.lane.b32.xlu0 %v661, 32
  %v663 = vpop.permute.xlu0 %662
  %v664 = vadd.f32 %v661, %v663
  %665 = vrot.lane.b32.xlu0 %v664, 64
  %v666 = vpop.permute.xlu0 %665
  %v667 = vadd.f32 %v664, %v666
  %v668 = vmul.f32 %v667, 0.001953125
  %v669 = vperm.slane %v668, 0
  %v670 = vsub.f32 %v643, %v669
  %v671 = vsub.f32 %v644, %v669
  %v672 = vsub.f32 %v645, %v669
  %v673 = vsub.f32 %v646, %v669
  %v674 = vmul.f32 %v670, %v670
  %v675 = vmul.f32 %v671, %v671
  %v676 = vmul.f32 %v672, %v672
  %v677 = vmul.f32 %v673, %v673
  %v678 = vadd.f32 %v674, %v675
  %v679 = vadd.f32 %v678, %v676
  %v680 = vadd.f32 %v679, %v677
  %v681 = vrot.slane %v680, 4
  %v682 = vadd.f32 %v680, %v681
  %v683 = vrot.slane %v682, 2
  %v684 = vadd.f32 %v682, %v683
  %v685 = vrot.slane %v684, 1
  %v686 = vadd.f32 %v684, %v685
  %687 = vrot.lane.b32.xlu0 %v686, 8
  %v688 = vpop.permute.xlu0 %687
  %v689 = vadd.f32 %v686, %v688
  %690 = vrot.lane.b32.xlu0 %v689, 16
  %v691 = vpop.permute.xlu0 %690
  %v692 = vadd.f32 %v689, %v691
  %693 = vrot.lane.b32.xlu0 %v692, 32
  %v694 = vpop.permute.xlu0 %693
  %v695 = vadd.f32 %v692, %v694
  %696 = vrot.lane.b32.xlu0 %v695, 64
  %v697 = vpop.permute.xlu0 %696
  %v698 = vadd.f32 %v695, %v697
  %v699 = vmul.f32 %v698, 0.001953125
  %v700 = vadd.f32 %v699, 1e-05
  %v701 = vrsqrt.pop %v700
  %v702 = vmul.f32 %v701, %v700
  %v703 = vmul.f32 %v702, %v701
  %v704 = vmul.f32 0.5, %v703
  %v705 = vsub.f32 1.5, %v704
  %v706 = vmul.f32 %v701, %v705
  %vm707 = vweird.f32 %v700
  %vm708 = vweird.f32 %v701
  %vm709 = vmor %vm707, %vm708
  %v710 = vsel %vm709, %v701, %v706
  %v712 = vrot.slane %v710, 6
  %v714 = vmul.f32 %v79, %v712
  %v716 = vrot.slane %v714, 2
  %v718 = vmul.f32 %v668, %v716
  %v720 = vrot.slane %v718, 5
  %v722 = vsub.f32 %v79, %v720
  %v723 = vperm.slane %v714, 2
  %v724 = vmul.f32 %v643, %v723
  %v725 = vmul.f32 %v644, %v723
  %v726 = vmul.f32 %v645, %v723
  %v727 = vmul.f32 %v646, %v723
  %v728 = vperm.slane %v722, 3
  %v729 = vadd.f32 %v724, %v728
  %v730 = vadd.f32 %v725, %v728
  %v731 = vadd.f32 %v726, %v728
  %v732 = vadd.f32 %v727, %v728
  %v733 = vmax.f32 %v729, 0.0
  %v734 = vmax.f32 %v730, 0.0
  %v735 = vmax.f32 %v731, 0.0
  %v736 = vmax.f32 %v732, 0.0
  %737 = vst [vmem:[%s4] sm:$0xff] %v733
  %738 = vst [vmem:[%s4 + $0x8] sm:$0xff] %v734
  %739 = vst [vmem:[%s4 + $0x10] sm:$0xff] %v735
  %740 = vst [vmem:[%s4 + $0x18] sm:$0xff] %v736
  // Predicated region
  $region18: #{double_conv.1} parent=0 // pred_check
    _
  $region19: #{double_conv.1} parent=0 // pred_check_branch
    %742 = sbr.rel (0) target = $region21
  $region20: #{double_conv.1} parent=0 // pred_region
    _
  $region21: #{double_conv.1} parent=0 // pred_fallthru
    _
  // Predicated region
  $region22: #{double_conv.1} parent=0 // pred_check
    _
  $region23: #{double_conv.1} parent=0 // pred_check_branch
    %744 = sbr.rel (0) target = $region25
  $region24: #{double_conv.1} parent=0 // pred_region
    _
  $region25: #{double_conv.1} parent=0 // pred_fallthru
    _

</llo_original>
